<compile_context>
chip_gen: v7x
topology: tpu7x:2x2x1
jax: 0.10.0
libtpu: 0.0.40
codegen_flags: <defaults>
</compile_context>

<pallas_src>
import jax
import jax.numpy as jnp
from jax.experimental import pallas as pl
from jax.experimental.pallas import tpu as pltpu


# ----------------------------------------------------------------------------- kernel
def _policy_mu_kernel(x_ref, w1_ref, b1_ref, w2_ref, b2_ref, w3_ref, b3_ref, mu_ref):
    """3-layer MLP mu head, fused, weights VMEM-resident (constant index_maps)."""
    # Layer 1: (TB, S) @ (S, 256) in full f32 (K=state_dim is tiny; keeps accuracy).
    h1 = jnp.dot(x_ref[...], w1_ref[...], preferred_element_type=jnp.float32)
    h1 = jnp.maximum(h1 + b1_ref[...], 0.0)

    # Layers 2 & 3 use pre-cast weights (bf16 by default); accumulation stays f32,
    # only the per-tile activations are cast (cheap, unavoidable).
    cdt = w2_ref.dtype
    h2 = jnp.dot(h1.astype(cdt), w2_ref[...], preferred_element_type=jnp.float32)
    h2 = jnp.maximum(h2 + b2_ref[...], 0.0)

    logits = jnp.dot(h2.astype(cdt), w3_ref[...], preferred_element_type=jnp.float32)
    # Lane-dense padded head: padded columns see tanh(0) = 0, sliced off in wrapper.
    mu_ref[...] = (2.0 * jnp.tanh(logits + b3_ref[...])).astype(mu_ref.dtype)


# ----------------------------------------------------------------------------- param prep (once)
def prepare_params(params, *, compute_dtype=jnp.bfloat16):
    """One-time parameter preparation (hoisted out of the per-call hot path).

    - zero-pads W3/b3 to a lane-dense 128-column head,
    - pre-casts W2 / W3 to `compute_dtype` (default bf16 MXU operands),
    - reshapes biases to (1, H) f32 rows for in-kernel broadcast.
    """
    w1, b1 = params["w1"], params["b1"]
    w2, b2 = params["w2"], params["b2"]
    w3, b3 = params["w3"], params["b3"]
    H, A = w3.shape

    A_pad = max(128, ((A + 127) // 128) * 128)
    w3p = jnp.zeros((H, A_pad), w3.dtype).at[:, :A].set(w3)
    b3p = jnp.zeros((A_pad,), b3.dtype).at[:A].set(b3)

    return {
        "w1": w1.astype(jnp.float32),                 # first layer stays f32
        "b1": b1.reshape(1, -1).astype(jnp.float32),
        "w2": w2.astype(compute_dtype),
        "b2": b2.reshape(1, -1).astype(jnp.float32),
        "w3p": w3p.astype(compute_dtype),
        "b3p": b3p.reshape(1, -1).astype(jnp.float32),
        "logs": params["logs"],
        "act_dim": int(A),
    }


# ----------------------------------------------------------------------------- tiling
def _num_tensorcores():
    """Best-effort TensorCore count per chip: v7x has 2, v5e/v6e have 1."""
    try:
        kind = (getattr(jax.devices()[0], "device_kind", "") or "").lower()
        if "v7" in kind:
            return 2
    except Exception:
        pass
    return 1


def _choose_tiling(batch, n_cores, max_rows_per_tile=2048):
    """Pick (tile_rows, padded_batch, n_tiles).

    Single tile on 1-TC chips (kills per-step pipeline overhead); an even number
    of tiles on 2-TC chips so both cores get work.  Rows padded only to the next
    multiple of 8 (sublane alignment), never to a multiple of 128.
    """
    n_tiles = max(n_cores, -(-batch // max_rows_per_tile))
    if n_cores > 1:
        n_tiles = -(-n_tiles // n_cores) * n_cores      # keep per-core counts equal
    tb = -(-batch // n_tiles)
    tb = -(-tb // 8) * 8                                # sublane-align
    return tb, tb * n_tiles, n_tiles


# ----------------------------------------------------------------------------- forward
def policy_net_forward(x, prepped):
    """x: (B, state_dim) f32.  prepped: output of prepare_params.  Returns (mu, sigma).

    NOTE: at B=1 this call is pure launch + weight-DMA overhead; batch environment
    states (vmap / stack) before calling in an A2C rollout loop.
    """
    w1, b1 = prepped["w1"], prepped["b1"]
    w2, b2 = prepped["w2"], prepped["b2"]
    w3p, b3p = prepped["w3p"], prepped["b3p"]
    A = prepped["act_dim"]

    B, S = x.shape
    H = w1.shape[1]
    A_pad = w3p.shape[1]

    TB, B_pad, n_tiles = _choose_tiling(B, _num_tensorcores())
    xp = x if B_pad == B else jnp.zeros((B_pad, S), x.dtype).at[:B, :].set(x)

    weight_bytes = (w1.size * w1.dtype.itemsize
                    + w2.size * w2.dtype.itemsize
                    + w3p.size * w3p.dtype.itemsize
                    + (2 * H + A_pad) * 4)
    cost = pl.CostEstimate(
        flops=2 * B_pad * (S * H + H * H + H * A_pad),
        transcendentals=B_pad * A_pad,
        bytes_accessed=int(xp.size * xp.dtype.itemsize + weight_bytes + B_pad * A_pad * 4),
    )

    mu_pad = pl.pallas_call(
        _policy_mu_kernel,
        out_shape=jax.ShapeDtypeStruct((B_pad, A_pad), jnp.float32),
        grid_spec=pltpu.PrefetchScalarGridSpec(
            num_scalar_prefetch=0,
            grid=(n_tiles,),
            in_specs=[
                pl.BlockSpec((TB, S), lambda i: (i, 0)),       # x tile (pipelined)
                pl.BlockSpec((S, H), lambda i: (0, 0)),        # W1 (f32, resident)
                pl.BlockSpec((1, H), lambda i: (0, 0)),        # b1
                pl.BlockSpec((H, H), lambda i: (0, 0)),        # W2 (pre-cast, resident)
                pl.BlockSpec((1, H), lambda i: (0, 0)),        # b2
                pl.BlockSpec((H, A_pad), lambda i: (0, 0)),    # W3 padded (pre-cast, resident)
                pl.BlockSpec((1, A_pad), lambda i: (0, 0)),    # b3 padded
            ],
            out_specs=pl.BlockSpec((TB, A_pad), lambda i: (i, 0)),
        ),
        compiler_params=pltpu.CompilerParams(
            # Batch tiles are independent -> v7x shards them across both TensorCores.
            dimension_semantics=("parallel",),
        ),
        cost_estimate=cost,
    )(xp, w1, b1, w2, b2, w3p, b3p)

    mu = mu_pad[:B, :A]

    # sigma is state independent: plain JAX with the numerically stable softplus.
    sigma = jnp.sqrt(jax.nn.softplus(prepped["logs"]) + 1e-4)
    return mu, sigma


# ----------------------------------------------------------------------------- init / reference
def init_params(key, state_dim, act_dim, hidden=256):
    """Deterministic init mimicking PyTorch Linear default U[-1/sqrt(fan_in), 1/sqrt(fan_in)]."""
    ks = jax.random.split(key, 6)

    def lin(kw, kb, fan_in, fan_out):
        bound = 1.0 / jnp.sqrt(jnp.float32(fan_in))
        w = jax.random.uniform(kw, (fan_in, fan_out), jnp.float32, -bound, bound)
        b = jax.random.uniform(kb, (fan_out,), jnp.float32, -bound, bound)
        return w, b

    w1, b1 = lin(ks[0], ks[1], state_dim, hidden)
    w2, b2 = lin(ks[2], ks[3], hidden, hidden)
    w3, b3 = lin(ks[4], ks[5], hidden, act_dim)
    logs = jnp.zeros((act_dim,), jnp.float32)  # nn.Parameter(torch.zeros(act_dim))
    return {"w1": w1, "b1": b1, "w2": w2, "b2": b2, "w3": w3, "b3": b3, "logs": logs}


def _reference_forward(x, p):
    h = jnp.maximum(x @ p["w1"] + p["b1"], 0.0)
    h = jnp.maximum(h @ p["w2"] + p["b2"], 0.0)
    mu = 2.0 * jnp.tanh(h @ p["w3"] + p["b3"])
    sigma = jnp.sqrt(jax.nn.softplus(p["logs"]) + 1e-4)
    return mu, sigma


if __name__ == "__main__":
    key = jax.random.PRNGKey(0)
    k_param, k_x = jax.random.split(key)

    state_dim, act_dim, hidden = 8, 4, 256
    batch = 256  # feed >=128 rows per call so the MXU is actually used

    params = init_params(k_param, state_dim, act_dim, hidden)
    x = jax.random.normal(k_x, (batch, state_dim), jnp.float32)

    mu_ref, sigma_ref = _reference_forward(x, params)

    # Default path: bf16 MXU operands (layers 2/3), f32 accumulation + elementwise.
    prepped = prepare_params(params)
    mu, sigma = jax.block_until_ready(policy_net_forward(x, prepped))
    assert mu.shape == (batch, act_dim)
    assert sigma.shape == (act_dim,)
    assert jnp.allclose(mu, mu_ref, atol=1e-1, rtol=0.0)
    assert jnp.allclose(sigma, sigma_ref, atol=1e-6, rtol=1e-6)

    # Full-f32 path: tight tolerance against the reference.
    prepped_f32 = prepare_params(params, compute_dtype=jnp.float32)
    mu_f32, _ = jax.block_until_ready(policy_net_forward(x, prepped_f32))
    assert jnp.allclose(mu_f32, mu_ref, atol=1e-4, rtol=1e-4)

    # Small / ragged batch: pads <= 7 rows, single tile on 1-TC chips.
    mu_s, _ = jax.block_until_ready(policy_net_forward(x[:5], prepped_f32))
    assert jnp.allclose(mu_s, mu_ref[:5], atol=1e-4, rtol=1e-4)

    # TODO(synk): the .act() path (Normal sampling + clamp + .item()) is host/JAX-side
    # control logic, intentionally left outside the kernel.
    print("KERNEL_OK")
</pallas_src>

<mosaic_0001>
module attributes {stable_mosaic.version = 11 : i64} {
  func.func @_policy_mu_kernel(%arg0: i32, %arg1: memref<256x8xf32, #tpu.memory_space<vmem>>, %arg2: memref<8x256xf32, #tpu.memory_space<vmem>>, %arg3: memref<1x256xf32, #tpu.memory_space<vmem>>, %arg4: memref<256x256xbf16, #tpu.memory_space<vmem>>, %arg5: memref<1x256xf32, #tpu.memory_space<vmem>>, %arg6: memref<256x128xbf16, #tpu.memory_space<vmem>>, %arg7: memref<1x128xf32, #tpu.memory_space<vmem>>, %arg8: memref<256x128xf32, #tpu.memory_space<vmem>>) attributes {dimension_semantics = [#tpu.dimension_semantics<parallel>], iteration_bounds = array<i64: 1>, scalar_prefetch = 0 : i64, scratch_operands = 0 : i64, tpu.core_type = #tpu.core_type<tc>, window_params = [{transform_indices = @transform_0, window_bounds = array<i64: 256, 8>}, {pipeline_mode = #tpu.pipeline_mode<synchronous>, transform_indices = @transform_1, window_bounds = array<i64: 8, 256>}, {pipeline_mode = #tpu.pipeline_mode<synchronous>, transform_indices = @transform_2, window_bounds = array<i64: 1, 256>}, {pipeline_mode = #tpu.pipeline_mode<synchronous>, transform_indices = @transform_3, window_bounds = array<i64: 256, 256>}, {pipeline_mode = #tpu.pipeline_mode<synchronous>, transform_indices = @transform_4, window_bounds = array<i64: 1, 256>}, {pipeline_mode = #tpu.pipeline_mode<synchronous>, transform_indices = @transform_5, window_bounds = array<i64: 256, 128>}, {pipeline_mode = #tpu.pipeline_mode<synchronous>, transform_indices = @transform_6, window_bounds = array<i64: 1, 128>}, {transform_indices = @transform_7, window_bounds = array<i64: 256, 128>}]} {
    %c0 = arith.constant 0 : index
    %c0_0 = arith.constant 0 : index
    %0 = vector.load %arg1[%c0, %c0_0] : memref<256x8xf32, #tpu.memory_space<vmem>>, vector<256x8xf32>
    %c0_1 = arith.constant 0 : index
    %c0_2 = arith.constant 0 : index
    %1 = vector.load %arg2[%c0_1, %c0_2] : memref<8x256xf32, #tpu.memory_space<vmem>>, vector<8x256xf32>
    %cst = arith.constant dense<0.000000e+00> : vector<256x256xf32>
    %2 = tpu.matmul %0, %1, %cst {dimension_numbers = #tpu.dot_dimension_numbers<[1], [0], [0], [1], [0, 0, 1, 1], [], []>} : vector<256x8xf32>, vector<8x256xf32>, vector<256x256xf32> -> vector<256x256xf32>
    %c0_3 = arith.constant 0 : index
    %c0_4 = arith.constant 0 : index
    %3 = vector.load %arg3[%c0_3, %c0_4] : memref<1x256xf32, #tpu.memory_space<vmem>>, vector<1x256xf32>
    %4 = vector.broadcast %3 : vector<1x256xf32> to vector<256x256xf32>
    %5 = arith.addf %2, %4 : vector<256x256xf32>
    %cst_5 = arith.constant 0.000000e+00 : f32
    %6 = vector.broadcast %cst_5 : f32 to vector<256x256xf32>
    %7 = arith.maximumf %5, %6 : vector<256x256xf32>
    %8 = arith.truncf %7 : vector<256x256xf32> to vector<256x256xbf16>
    %c0_6 = arith.constant 0 : index
    %c0_7 = arith.constant 0 : index
    %9 = vector.load %arg4[%c0_6, %c0_7] : memref<256x256xbf16, #tpu.memory_space<vmem>>, vector<256x256xbf16>
    %cst_8 = arith.constant dense<0.000000e+00> : vector<256x256xf32>
    %10 = tpu.matmul %8, %9, %cst_8 {dimension_numbers = #tpu.dot_dimension_numbers<[1], [0], [0], [1], [0, 0, 1, 1], [], []>} : vector<256x256xbf16>, vector<256x256xbf16>, vector<256x256xf32> -> vector<256x256xf32>
    %c0_9 = arith.constant 0 : index
    %c0_10 = arith.constant 0 : index
    %11 = vector.load %arg5[%c0_9, %c0_10] : memref<1x256xf32, #tpu.memory_space<vmem>>, vector<1x256xf32>
    %12 = vector.broadcast %11 : vector<1x256xf32> to vector<256x256xf32>
    %13 = arith.addf %10, %12 : vector<256x256xf32>
    %cst_11 = arith.constant 0.000000e+00 : f32
    %14 = vector.broadcast %cst_11 : f32 to vector<256x256xf32>
    %15 = arith.maximumf %13, %14 : vector<256x256xf32>
    %16 = arith.truncf %15 : vector<256x256xf32> to vector<256x256xbf16>
    %c0_12 = arith.constant 0 : index
    %c0_13 = arith.constant 0 : index
    %17 = vector.load %arg6[%c0_12, %c0_13] : memref<256x128xbf16, #tpu.memory_space<vmem>>, vector<256x128xbf16>
    %cst_14 = arith.constant dense<0.000000e+00> : vector<256x128xf32>
    %18 = tpu.matmul %16, %17, %cst_14 {dimension_numbers = #tpu.dot_dimension_numbers<[1], [0], [0], [1], [0, 0, 1, 1], [], []>} : vector<256x256xbf16>, vector<256x128xbf16>, vector<256x128xf32> -> vector<256x128xf32>
    %c0_15 = arith.constant 0 : index
    %c0_16 = arith.constant 0 : index
    %19 = vector.load %arg7[%c0_15, %c0_16] : memref<1x128xf32, #tpu.memory_space<vmem>>, vector<1x128xf32>
    %20 = vector.broadcast %19 : vector<1x128xf32> to vector<256x128xf32>
    %21 = arith.addf %18, %20 : vector<256x128xf32>
    %22 = math.tanh %21 : vector<256x128xf32>
    %cst_17 = arith.constant 2.000000e+00 : f32
    %23 = vector.broadcast %cst_17 : f32 to vector<256x128xf32>
    %24 = arith.mulf %23, %22 : vector<256x128xf32>
    %c0_18 = arith.constant 0 : index
    %c0_19 = arith.constant 0 : index
    %25 = vector.load %arg8[%c0_18, %c0_19] : memref<256x128xf32, #tpu.memory_space<vmem>>, vector<256x128xf32>
    tpu.vector_store %arg8[%c0_18, %c0_19], %24 {strides = array<i32>} : memref<256x128xf32, #tpu.memory_space<vmem>>, vector<256x128xf32>,
    return
  }
  func.func @transform_0(%arg0: i32) -> (i32, i32) {
    %c0_i32 = arith.constant 0 : i32
    %c0_i32_0 = arith.constant 0 : i32
    return %arg0, %c0_i32 : i32, i32
  }
  func.func @transform_1(%arg0: i32) -> (i32, i32) {
    %c0_i32 = arith.constant 0 : i32
    %c0_i32_0 = arith.constant 0 : i32
    %c0_i32_1 = arith.constant 0 : i32
    return %c0_i32, %c0_i32_0 : i32, i32
  }
  func.func @transform_2(%arg0: i32) -> (i32, i32) {
    %c0_i32 = arith.constant 0 : i32
    %c0_i32_0 = arith.constant 0 : i32
    %c0_i32_1 = arith.constant 0 : i32
    return %c0_i32, %c0_i32_0 : i32, i32
  }
  func.func @transform_3(%arg0: i32) -> (i32, i32) {
    %c0_i32 = arith.constant 0 : i32
    %c0_i32_0 = arith.constant 0 : i32
    %c0_i32_1 = arith.constant 0 : i32
    return %c0_i32, %c0_i32_0 : i32, i32
  }
  func.func @transform_4(%arg0: i32) -> (i32, i32) {
    %c0_i32 = arith.constant 0 : i32
    %c0_i32_0 = arith.constant 0 : i32
    %c0_i32_1 = arith.constant 0 : i32
    return %c0_i32, %c0_i32_0 : i32, i32
  }
  func.func @transform_5(%arg0: i32) -> (i32, i32) {
    %c0_i32 = arith.constant 0 : i32
    %c0_i32_0 = arith.constant 0 : i32
    %c0_i32_1 = arith.constant 0 : i32
    return %c0_i32, %c0_i32_0 : i32, i32
  }
  func.func @transform_6(%arg0: i32) -> (i32, i32) {
    %c0_i32 = arith.constant 0 : i32
    %c0_i32_0 = arith.constant 0 : i32
    %c0_i32_1 = arith.constant 0 : i32
    return %c0_i32, %c0_i32_0 : i32, i32
  }
  func.func @transform_7(%arg0: i32) -> (i32, i32) {
    %c0_i32 = arith.constant 0 : i32
    %c0_i32_0 = arith.constant 0 : i32
    return %arg0, %c0_i32 : i32, i32
  }
}

</mosaic_0001>

<llo_original>
// kernel: tpu_custom_call.1
$region0: #{tpu_custom_call.1}
  #allocation0 [shape = 'u32[]', space=smem, size = 0x4, offset = 0x4, fixed_abs, tag = 'smem constant byte address 0x4 - core index']
  #allocation1 [shape = 'u32[144,128]{1,0:T(1,128)}', space=vmem, size = 0x12000, scoped, tag = 'internal scratch']
  %s0 = inlined_call_operand.vmem [shape: f32[256,8], index: 0, kind: input, shape index: {}]
  %s1 = inlined_call_operand.vmem [shape: f32[8,256], index: 1, kind: input, shape index: {}]
  %s2 = inlined_call_operand.vmem [shape: f32[1,256], index: 2, kind: input, shape index: {}]
  %s3 = inlined_call_operand.vmem [shape: bf16[256,256], index: 3, kind: input, shape index: {}]
  %s4 = inlined_call_operand.vmem [shape: f32[1,256], index: 4, kind: input, shape index: {}]
  %s5 = inlined_call_operand.hbm [shape: bf16[256,128], index: 5, kind: input, shape index: {}]
  %s6 = inlined_call_operand.vmem [shape: f32[1,128], index: 6, kind: input, shape index: {}]
  %s7 = inlined_call_operand.hbm [shape: f32[256,128], index: 7, kind: output, shape index: {}]
  %s8 = sld [smem:[#allocation0]]
  $region42: #{tpu_custom_call.1} parent=0
    _
  %s10 = ssub.s32 1, %s8
  %s11 = scalar_select 0, %s10, %s8
  $region1: #{tpu_custom_call.1} parent=0
    #allocation2 [shape = 'u8[65536]{0}', space=vmem, size = 0x10000, scoped, tag = 'input window, operand 5, single buffered']
    #allocation3 [shape = 's32[1]{0}', space=sflag, size = 0x4, scoped, tag = 'scoped memory for tpu_custom_call.1']
    #allocation4 [shape = 's32[1]{0}', space=sflag, size = 0x4, scoped, tag = 'scoped memory for tpu_custom_call.1']
    #allocation5 [shape = 'u8[131072]{0}', space=vmem, size = 0x20000, scoped, tag = 'output window, operand 0, single buffered']
    %12 = vsyncpa [#allocation3], 0
    %13 = vsyncpa [#allocation4], 0
    // Predicated region
    $region2: #{tpu_custom_call.1} parent=1 // pred_check
      _
    $region3: #{tpu_custom_call.1} parent=1 // pred_check_branch
      %15 = sbr.rel (0) target = $region5
    $region4: #{tpu_custom_call.1} parent=1 // pred_region
      _
    $region5: #{tpu_custom_call.1} parent=1 // pred_fallthru
      _
    // Predicated region
    $region6: #{tpu_custom_call.1} parent=1 // pred_check
      _
    $region7: #{tpu_custom_call.1} parent=1 // pred_check_branch
      %17 = sbr.rel (0) target = $region9
    $region8: #{tpu_custom_call.1} parent=1 // pred_region
      _
    $region9: #{tpu_custom_call.1} parent=1 // pred_fallthru
      _
    // Predicated region
    $region10: #{tpu_custom_call.1} parent=1 // pred_check
      _
    $region11: #{tpu_custom_call.1} parent=1 // pred_check_branch
      %19 = sbr.rel (0) target = $region13
    $region12: #{tpu_custom_call.1} parent=1 // pred_region
      _
    $region13: #{tpu_custom_call.1} parent=1 // pred_fallthru
      _
    // Predicated region
    $region14: #{tpu_custom_call.1} parent=1 // pred_check
      _
    $region15: #{tpu_custom_call.1} parent=1 // pred_check_branch
      %21 = sbr.rel (0) target = $region17
    $region16: #{tpu_custom_call.1} parent=1 // pred_region
      _
    $region17: #{tpu_custom_call.1} parent=1 // pred_fallthru
      _
    // Predicated region
    $region18: #{tpu_custom_call.1} parent=1 // pred_check
      _
    $region19: #{tpu_custom_call.1} parent=1 // pred_check_branch
      %23 = sbr.rel (0) target = $region21
    $region20: #{tpu_custom_call.1} parent=1 // pred_region
      _
    $region21: #{tpu_custom_call.1} parent=1 // pred_fallthru
      _
    // Predicated region
    $region22: #{tpu_custom_call.1} parent=1 // pred_check
      _
    $region23: #{tpu_custom_call.1} parent=1 // pred_check_branch
      %25 = sbr.rel (0) target = $region25
    $region24: #{tpu_custom_call.1} parent=1 // pred_region
      %s27 = ssub.s32 2048, 2048
      %28 = vsyncadd [#allocation3], %s27
      %s29 = sshll.u32 [#allocation2], 4
      %s30 = int_to_ptr.vmem [resolvable:$true] %s29
      %35 = dma.hbm_to_vmem [thread:$0]  %s5, 2048, %s30, [#allocation3], 64, 64, 4
    $region25: #{tpu_custom_call.1} parent=1 // pred_fallthru
      _
    // Predicated region
    $region26: #{tpu_custom_call.1} parent=1 // pred_check
      _
    $region27: #{tpu_custom_call.1} parent=1 // pred_check_branch
      %37 = sbr.rel (0) target = $region29
    $region28: #{tpu_custom_call.1} parent=1 // pred_region
      _
    $region29: #{tpu_custom_call.1} parent=1 // pred_fallthru
      _
    // Predicated region
    $region30: #{tpu_custom_call.1} parent=1 // pred_check
      _
    $region31: #{tpu_custom_call.1} parent=1 // pred_check_branch
      %39 = sbr.rel (0) target = $region33
    $region32: #{tpu_custom_call.1} parent=1 // pred_region
      %40 = dma.done [#allocation3], 2048
    $region33: #{tpu_custom_call.1} parent=1 // pred_fallthru
      _
    %v42 = vld [vmem:[%s0] sm:$0xff]
    %v43 = vld [vmem:[%s0 + $0x8] sm:$0xff]
    %v44 = vld [vmem:[%s0 + $0x10] sm:$0xff]
    %v45 = vld [vmem:[%s0 + $0x18] sm:$0xff]
    %v46 = vld [vmem:[%s0 + $0x20] sm:$0xff]
    %v47 = vld [vmem:[%s0 + $0x28] sm:$0xff]
    %v48 = vld [vmem:[%s0 + $0x30] sm:$0xff]
    %v49 = vld [vmem:[%s0 + $0x38] sm:$0xff]
    %v50 = vld [vmem:[%s0 + $0x40] sm:$0xff]
    %v51 = vld [vmem:[%s0 + $0x48] sm:$0xff]
    %v52 = vld [vmem:[%s0 + $0x50] sm:$0xff]
    %v53 = vld [vmem:[%s0 + $0x58] sm:$0xff]
    %v54 = vld [vmem:[%s0 + $0x60] sm:$0xff]
    %v55 = vld [vmem:[%s0 + $0x68] sm:$0xff]
    %v56 = vld [vmem:[%s0 + $0x70] sm:$0xff]
    %v57 = vld [vmem:[%s0 + $0x78] sm:$0xff]
    %v58 = vld [vmem:[%s0 + $0x80] sm:$0xff]
    %v59 = vld [vmem:[%s0 + $0x88] sm:$0xff]
    %v60 = vld [vmem:[%s0 + $0x90] sm:$0xff]
    %v61 = vld [vmem:[%s0 + $0x98] sm:$0xff]
    %v62 = vld [vmem:[%s0 + $0xa0] sm:$0xff]
    %v63 = vld [vmem:[%s0 + $0xa8] sm:$0xff]
    %v64 = vld [vmem:[%s0 + $0xb0] sm:$0xff]
    %v65 = vld [vmem:[%s0 + $0xb8] sm:$0xff]
    %v66 = vld [vmem:[%s0 + $0xc0] sm:$0xff]
    %v67 = vld [vmem:[%s0 + $0xc8] sm:$0xff]
    %v68 = vld [vmem:[%s0 + $0xd0] sm:$0xff]
    %v69 = vld [vmem:[%s0 + $0xd8] sm:$0xff]
    %v70 = vld [vmem:[%s0 + $0xe0] sm:$0xff]
    %v71 = vld [vmem:[%s0 + $0xe8] sm:$0xff]
    %v72 = vld [vmem:[%s0 + $0xf0] sm:$0xff]
    %v73 = vld [vmem:[%s0 + $0xf8] sm:$0xff]
    %v74 = vld [vmem:[%s1] sm:$0xff]
    %v75 = vld [vmem:[%s1 + $0x8] sm:$0xff]
    %v76 = vld [vmem:[%s2] sm:$0x3]
    %v78 = vlaneseq
    %v79 = vshrl.u32 %v78, 7
    %v80 = vsub.s32 0, %v79
    %v81 = vrot.slane %v76, %v80
    %v82 = vlaneseq
    %v83 = vshrl.u32 %v82, 7
    %v84 = vsub.s32 1, %v83
    %v85 = vrot.slane %v76, %v84
    %vm88 = vcmask 64512
    %v90 = vsel %vm88, %v42, 0
    %v93 = vsel %vm88, %v43, 0
    %v96 = vsel %vm88, %v44, 0
    %v99 = vsel %vm88, %v45, 0
    %v102 = vsel %vm88, %v46, 0
    %v105 = vsel %vm88, %v47, 0
    %v108 = vsel %vm88, %v48, 0
    %v111 = vsel %vm88, %v49, 0
    %v114 = vsel %vm88, %v50, 0
    %v117 = vsel %vm88, %v51, 0
    %v120 = vsel %vm88, %v52, 0
    %v123 = vsel %vm88, %v53, 0
    %v126 = vsel %vm88, %v54, 0
    %v129 = vsel %vm88, %v55, 0
    %v132 = vsel %vm88, %v56, 0
    %v135 = vsel %vm88, %v57, 0
    %v138 = vsel %vm88, %v58, 0
    %v141 = vsel %vm88, %v59, 0
    %v144 = vsel %vm88, %v60, 0
    %v147 = vsel %vm88, %v61, 0
    %v150 = vsel %vm88, %v62, 0
    %v153 = vsel %vm88, %v63, 0
    %v156 = vsel %vm88, %v64, 0
    %v159 = vsel %vm88, %v65, 0
    %v162 = vsel %vm88, %v66, 0
    %v165 = vsel %vm88, %v67, 0
    %v168 = vsel %vm88, %v68, 0
    %v171 = vsel %vm88, %v69, 0
    %v174 = vsel %vm88, %v70, 0
    %v177 = vsel %vm88, %v71, 0
    %v180 = vsel %vm88, %v72, 0
    %v183 = vsel %vm88, %v73, 0
    %185 = vmatprep.subr.mxu0 %v75
    %186 = vmatpush1.msra.mxu0 %v74
    %187 = vmatprep.subr.mxu0 0.0
    %188 = vmatpush1.msra.mxu0 0.0
    %189 = vmatprep.subr.mxu0 0.0
    %190 = vmatpush1.msra.mxu0 0.0
    %191 = vmatprep.subr.mxu0 0.0
    %192 = vmatpush1.msra.mxu0 0.0
    %193 = vmatprep.subr.mxu0 0.0
    %194 = vmatpush1.msra.mxu0 0.0
    %195 = vmatprep.subr.mxu0 0.0
    %196 = vmatpush1.msra.mxu0 0.0
    %197 = vmatprep.subr.mxu0 0.0
    %198 = vmatpush1.msra.mxu0 0.0
    %199 = vmatprep.subr.mxu0 0.0
    %200 = vmatpush1.msra.mxu0 0.0
    %201 = vmatprep.subr.mxu0 0.0
    %202 = vmatpush1.msra.mxu0 0.0
    %203 = vmatprep.subr.mxu0 0.0
    %204 = vmatpush1.msra.mxu0 0.0
    %205 = vmatprep.subr.mxu0 0.0
    %206 = vmatpush1.msra.mxu0 0.0
    %207 = vmatprep.subr.mxu0 0.0
    %208 = vmatpush1.msra.mxu0 0.0
    %209 = vmatprep.subr.mxu0 0.0
    %210 = vmatpush1.msra.mxu0 0.0
    %211 = vmatprep.subr.mxu0 0.0
    %212 = vmatpush1.msra.mxu0 0.0
    %213 = vmatprep.subr.mxu0 0.0
    %214 = vmatpush1.msra.mxu0 0.0
    %215 = vmatprep.subr.mxu0 0.0
    %216 = vmatpush1.msra.mxu0 0.0
    %217 = vmatprep.subr.mxu0 0.0
    %218 = vmatpush1.msra.mxu0 0.0
    %219 = vmatprep.subr.mxu0 0.0
    %220 = vmatpush1.msra.mxu0 0.0
    %221 = vmatprep.subr.mxu0 0.0
    %222 = vmatpush1.msra.mxu0 0.0
    %223 = vmatprep.subr.mxu0 0.0
    %224 = vmatpush1.msra.mxu0 0.0
    %225 = vmatprep.subr.mxu0 0.0
    %226 = vmatpush1.msra.mxu0 0.0
    %227 = vmatprep.subr.mxu0 0.0
    %228 = vmatpush1.msra.mxu0 0.0
    %229 = vmatprep.subr.mxu0 0.0
    %230 = vmatpush1.msra.mxu0 0.0
    %231 = vmatprep.subr.mxu0 0.0
    %232 = vmatpush1.msra.mxu0 0.0
    %233 = vmatprep.subr.mxu0 0.0
    %234 = vmatpush1.msra.mxu0 0.0
    %235 = vmatprep.subr.mxu0 0.0
    %236 = vmatpush1.msra.mxu0 0.0
    %237 = vmatprep.subr.mxu0 0.0
    %238 = vmatpush1.msra.mxu0 0.0
    %239 = vmatprep.subr.mxu0 0.0
    %240 = vmatpush1.msra.mxu0 0.0
    %241 = vmatprep.subr.mxu0 0.0
    %242 = vmatpush1.msra.mxu0 0.0
    %243 = vmatprep.subr.mxu0 0.0
    %244 = vmatpush1.msra.mxu0 0.0
    %245 = vmatprep.subr.mxu0 0.0
    %246 = vmatpush1.msra.mxu0 0.0
    %247 = vmatprep.subr.mxu0 0.0
    %248 = vmatpush1.msra.mxu0 0.0
    %249 = vmatprep.mubr.f32.mxu0 0.0
    %250 = vmatmul.mubr.f32.gmra.mrb[0].mxu0 %v90
    %v251 = vpop.f32.mrb[0].mxu0
    %v252 = vadd.f32 %v81, %v251
    %v253 = vpop.f32.mrb[0].mxu0
    %v254 = vadd.f32 %v85, %v253
    %255 = vmatprep.mubr.f32.mxu0 0.0
    %256 = vmatmul.mubr.f32.gmra.mrb[0].mxu0 %v93
    %v257 = vpop.f32.mrb[0].mxu0
    %v258 = vadd.f32 %v81, %v257
    %v259 = vpop.f32.mrb[0].mxu0
    %v260 = vadd.f32 %v85, %v259
    %261 = vmatprep.mubr.f32.mxu0 0.0
    %262 = vmatmul.mubr.f32.gmra.mrb[0].mxu0 %v96
    %v263 = vpop.f32.mrb[0].mxu0
    %v264 = vadd.f32 %v81, %v263
    %v265 = vpop.f32.mrb[0].mxu0
    %v266 = vadd.f32 %v85, %v265
    %267 = vmatprep.mubr.f32.mxu0 0.0
    %268 = vmatmul.mubr.f32.gmra.mrb[0].mxu0 %v99
    %v269 = vpop.f32.mrb[0].mxu0
    %v270 = vadd.f32 %v81, %v269
    %v271 = vpop.f32.mrb[0].mxu0
    %v272 = vadd.f32 %v85, %v271
    %273 = vmatprep.mubr.f32.mxu0 0.0
    %274 = vmatmul.mubr.f32.gmra.mrb[0].mxu0 %v102
    %v275 = vpop.f32.mrb[0].mxu0
    %v276 = vadd.f32 %v81, %v275
    %v277 = vpop.f32.mrb[0].mxu0
    %v278 = vadd.f32 %v85, %v277
    %279 = vmatprep.mubr.f32.mxu0 0.0
    %280 = vmatmul.mubr.f32.gmra.mrb[0].mxu0 %v105
    %v281 = vpop.f32.mrb[0].mxu0
    %v282 = vadd.f32 %v81, %v281
    %v283 = vpop.f32.mrb[0].mxu0
    %v284 = vadd.f32 %v85, %v283
    %285 = vmatprep.mubr.f32.mxu0 0.0
    %286 = vmatmul.mubr.f32.gmra.mrb[0].mxu0 %v108
    %v287 = vpop.f32.mrb[0].mxu0
    %v288 = vadd.f32 %v81, %v287
    %v289 = vpop.f32.mrb[0].mxu0
    %v290 = vadd.f32 %v85, %v289
    %291 = vmatprep.mubr.f32.mxu0 0.0
    %292 = vmatmul.mubr.f32.gmra.mrb[0].mxu0 %v111
    %v293 = vpop.f32.mrb[0].mxu0
    %v294 = vadd.f32 %v81, %v293
    %v295 = vpop.f32.mrb[0].mxu0
    %v296 = vadd.f32 %v85, %v295
    %297 = vmatprep.mubr.f32.mxu0 0.0
    %298 = vmatmul.mubr.f32.gmra.mrb[0].mxu0 %v114
    %v299 = vpop.f32.mrb[0].mxu0
    %v300 = vadd.f32 %v81, %v299
    %v301 = vpop.f32.mrb[0].mxu0
    %v302 = vadd.f32 %v85, %v301
    %303 = vmatprep.mubr.f32.mxu0 0.0
    %304 = vmatmul.mubr.f32.gmra.mrb[0].mxu0 %v117
    %v305 = vpop.f32.mrb[0].mxu0
    %v306 = vadd.f32 %v81, %v305
    %v307 = vpop.f32.mrb[0].mxu0
    %v308 = vadd.f32 %v85, %v307
    %309 = vmatprep.mubr.f32.mxu0 0.0
    %310 = vmatmul.mubr.f32.gmra.mrb[0].mxu0 %v120
    %v311 = vpop.f32.mrb[0].mxu0
    %v312 = vadd.f32 %v81, %v311
    %v313 = vpop.f32.mrb[0].mxu0
    %v314 = vadd.f32 %v85, %v313
    %315 = vmatprep.mubr.f32.mxu0 0.0
    %316 = vmatmul.mubr.f32.gmra.mrb[0].mxu0 %v123
    %v317 = vpop.f32.mrb[0].mxu0
    %v318 = vadd.f32 %v81, %v317
    %v319 = vpop.f32.mrb[0].mxu0
    %v320 = vadd.f32 %v85, %v319
    %321 = vmatprep.mubr.f32.mxu0 0.0
    %322 = vmatmul.mubr.f32.gmra.mrb[0].mxu0 %v126
    %v323 = vpop.f32.mrb[0].mxu0
    %v324 = vadd.f32 %v81, %v323
    %v325 = vpop.f32.mrb[0].mxu0
    %v326 = vadd.f32 %v85, %v325
    %327 = vmatprep.mubr.f32.mxu0 0.0
    %328 = vmatmul.mubr.f32.gmra.mrb[0].mxu0 %v129
    %v329 = vpop.f32.mrb[0].mxu0
    %v330 = vadd.f32 %v81, %v329
    %v331 = vpop.f32.mrb[0].mxu0
    %v332 = vadd.f32 %v85, %v331
    %333 = vmatprep.mubr.f32.mxu0 0.0
    %334 = vmatmul.mubr.f32.gmra.mrb[0].mxu0 %v132
    %v335 = vpop.f32.mrb[0].mxu0
    %v336 = vadd.f32 %v81, %v335
    %v337 = vpop.f32.mrb[0].mxu0
    %v338 = vadd.f32 %v85, %v337
    %339 = vmatprep.mubr.f32.mxu0 0.0
    %340 = vmatmul.mubr.f32.gmra.mrb[0].mxu0 %v135
    %v341 = vpop.f32.mrb[0].mxu0
    %v342 = vadd.f32 %v81, %v341
    %v343 = vpop.f32.mrb[0].mxu0
    %v344 = vadd.f32 %v85, %v343
    %345 = vmatprep.mubr.f32.mxu0 0.0
    %346 = vmatmul.mubr.f32.gmra.mrb[0].mxu0 %v138
    %v347 = vpop.f32.mrb[0].mxu0
    %v348 = vadd.f32 %v81, %v347
    %v349 = vpop.f32.mrb[0].mxu0
    %v350 = vadd.f32 %v85, %v349
    %351 = vmatprep.mubr.f32.mxu0 0.0
    %352 = vmatmul.mubr.f32.gmra.mrb[0].mxu0 %v141
    %v353 = vpop.f32.mrb[0].mxu0
    %v354 = vadd.f32 %v81, %v353
    %v355 = vpop.f32.mrb[0].mxu0
    %v356 = vadd.f32 %v85, %v355
    %357 = vmatprep.mubr.f32.mxu0 0.0
    %358 = vmatmul.mubr.f32.gmra.mrb[0].mxu0 %v144
    %v359 = vpop.f32.mrb[0].mxu0
    %v360 = vadd.f32 %v81, %v359
    %v361 = vpop.f32.mrb[0].mxu0
    %v362 = vadd.f32 %v85, %v361
    %363 = vmatprep.mubr.f32.mxu0 0.0
    %364 = vmatmul.mubr.f32.gmra.mrb[0].mxu0 %v147
    %v365 = vpop.f32.mrb[0].mxu0
    %v366 = vadd.f32 %v81, %v365
    %v367 = vpop.f32.mrb[0].mxu0
    %v368 = vadd.f32 %v85, %v367
    %369 = vmatprep.mubr.f32.mxu0 0.0
    %370 = vmatmul.mubr.f32.gmra.mrb[0].mxu0 %v150
    %v371 = vpop.f32.mrb[0].mxu0
    %v372 = vadd.f32 %v81, %v371
    %v373 = vpop.f32.mrb[0].mxu0
    %v374 = vadd.f32 %v85, %v373
    %375 = vmatprep.mubr.f32.mxu0 0.0
    %376 = vmatmul.mubr.f32.gmra.mrb[0].mxu0 %v153
    %v377 = vpop.f32.mrb[0].mxu0
    %v378 = vadd.f32 %v81, %v377
    %v379 = vpop.f32.mrb[0].mxu0
    %v380 = vadd.f32 %v85, %v379
    %381 = vmatprep.mubr.f32.mxu0 0.0
    %382 = vmatmul.mubr.f32.gmra.mrb[0].mxu0 %v156
    %v383 = vpop.f32.mrb[0].mxu0
    %v384 = vadd.f32 %v81, %v383
    %v385 = vpop.f32.mrb[0].mxu0
    %v386 = vadd.f32 %v85, %v385
    %387 = vmatprep.mubr.f32.mxu0 0.0
    %388 = vmatmul.mubr.f32.gmra.mrb[0].mxu0 %v159
    %v389 = vpop.f32.mrb[0].mxu0
    %v390 = vadd.f32 %v81, %v389
    %v391 = vpop.f32.mrb[0].mxu0
    %v392 = vadd.f32 %v85, %v391
    %393 = vmatprep.mubr.f32.mxu0 0.0
    %394 = vmatmul.mubr.f32.gmra.mrb[0].mxu0 %v162
    %v395 = vpop.f32.mrb[0].mxu0
    %v396 = vadd.f32 %v81, %v395
    %v397 = vpop.f32.mrb[0].mxu0
    %v398 = vadd.f32 %v85, %v397
    %399 = vmatprep.mubr.f32.mxu0 0.0
    %400 = vmatmul.mubr.f32.gmra.mrb[0].mxu0 %v165
    %v401 = vpop.f32.mrb[0].mxu0
    %v402 = vadd.f32 %v81, %v401
    %v403 = vpop.f32.mrb[0].mxu0
    %v404 = vadd.f32 %v85, %v403
    %405 = vmatprep.mubr.f32.mxu0 0.0
    %406 = vmatmul.mubr.f32.gmra.mrb[0].mxu0 %v168
    %v407 = vpop.f32.mrb[0].mxu0
    %v408 = vadd.f32 %v81, %v407
    %v409 = vpop.f32.mrb[0].mxu0
    %v410 = vadd.f32 %v85, %v409
    %411 = vmatprep.mubr.f32.mxu0 0.0
    %412 = vmatmul.mubr.f32.gmra.mrb[0].mxu0 %v171
    %v413 = vpop.f32.mrb[0].mxu0
    %v414 = vadd.f32 %v81, %v413
    %v415 = vpop.f32.mrb[0].mxu0
    %v416 = vadd.f32 %v85, %v415
    %417 = vmatprep.mubr.f32.mxu0 0.0
    %418 = vmatmul.mubr.f32.gmra.mrb[0].mxu0 %v174
    %v419 = vpop.f32.mrb[0].mxu0
    %v420 = vadd.f32 %v81, %v419
    %v421 = vpop.f32.mrb[0].mxu0
    %v422 = vadd.f32 %v85, %v421
    %423 = vmatprep.mubr.f32.mxu0 0.0
    %424 = vmatmul.mubr.f32.gmra.mrb[0].mxu0 %v177
    %v425 = vpop.f32.mrb[0].mxu0
    %v426 = vadd.f32 %v81, %v425
    %v427 = vpop.f32.mrb[0].mxu0
    %v428 = vadd.f32 %v85, %v427
    %429 = vmatprep.mubr.f32.mxu0 0.0
    %430 = vmatmul.mubr.f32.gmra.mrb[0].mxu0 %v180
    %v431 = vpop.f32.mrb[0].mxu0
    %v432 = vadd.f32 %v81, %v431
    %v433 = vpop.f32.mrb[0].mxu0
    %v434 = vadd.f32 %v85, %v433
    %435 = vmatprep.mubr.f32.mxu0 0.0
    %436 = vmatmul.mubr.f32.gmra.mrb[0].mxu0 %v183
    %v437 = vpop.f32.mrb[0].mxu0
    %v438 = vadd.f32 %v81, %v437
    %v439 = vpop.f32.mrb[0].mxu0
    %v440 = vadd.f32 %v85, %v439
    %441 = vdwg.mxu0
    %v442 = vmax.f32 %v252, 0.0
    %v443 = vmax.f32 %v254, 0.0
    %v444 = vmax.f32 %v258, 0.0
    %v445 = vmax.f32 %v260, 0.0
    %v446 = vmax.f32 %v264, 0.0
    %v447 = vmax.f32 %v266, 0.0
    %v448 = vmax.f32 %v270, 0.0
    %v449 = vmax.f32 %v272, 0.0
    %v450 = vmax.f32 %v276, 0.0
    %v451 = vmax.f32 %v278, 0.0
    %v452 = vmax.f32 %v282, 0.0
    %v453 = vmax.f32 %v284, 0.0
    %v454 = vmax.f32 %v288, 0.0
    %v455 = vmax.f32 %v290, 0.0
    %v456 = vmax.f32 %v294, 0.0
    %v457 = vmax.f32 %v296, 0.0
    %v458 = vmax.f32 %v300, 0.0
    %v459 = vmax.f32 %v302, 0.0
    %v460 = vmax.f32 %v306, 0.0
    %v461 = vmax.f32 %v308, 0.0
    %v462 = vmax.f32 %v312, 0.0
    %v463 = vmax.f32 %v314, 0.0
    %v464 = vmax.f32 %v318, 0.0
    %v465 = vmax.f32 %v320, 0.0
    %v466 = vmax.f32 %v324, 0.0
    %v467 = vmax.f32 %v326, 0.0
    %v468 = vmax.f32 %v330, 0.0
    %v469 = vmax.f32 %v332, 0.0
    %v470 = vmax.f32 %v336, 0.0
    %v471 = vmax.f32 %v338, 0.0
    %v472 = vmax.f32 %v342, 0.0
    %v473 = vmax.f32 %v344, 0.0
    %v474 = vmax.f32 %v348, 0.0
    %v475 = vmax.f32 %v350, 0.0
    %v476 = vmax.f32 %v354, 0.0
    %v477 = vmax.f32 %v356, 0.0
    %v478 = vmax.f32 %v360, 0.0
    %v479 = vmax.f32 %v362, 0.0
    %v480 = vmax.f32 %v366, 0.0
    %v481 = vmax.f32 %v368, 0.0
    %v482 = vmax.f32 %v372, 0.0
    %v483 = vmax.f32 %v374, 0.0
    %v484 = vmax.f32 %v378, 0.0
    %v485 = vmax.f32 %v380, 0.0
    %v486 = vmax.f32 %v384, 0.0
    %v487 = vmax.f32 %v386, 0.0
    %v488 = vmax.f32 %v390, 0.0
    %v489 = vmax.f32 %v392, 0.0
    %v490 = vmax.f32 %v396, 0.0
    %v491 = vmax.f32 %v398, 0.0
    %v492 = vmax.f32 %v402, 0.0
    %v493 = vmax.f32 %v404, 0.0
    %v494 = vmax.f32 %v408, 0.0
    %v495 = vmax.f32 %v410, 0.0
    %v496 = vmax.f32 %v414, 0.0
    %v497 = vmax.f32 %v416, 0.0
    %v498 = vmax.f32 %v420, 0.0
    %v499 = vmax.f32 %v422, 0.0
    %v500 = vmax.f32 %v426, 0.0
    %v501 = vmax.f32 %v428, 0.0
    %v502 = vmax.f32 %v432, 0.0
    %v503 = vmax.f32 %v434, 0.0
    %v504 = vmax.f32 %v438, 0.0
    %v505 = vmax.f32 %v440, 0.0
    %v506 = vpack.c.bf16 %v444, %v442
    %v507 = vpack.c.bf16 %v445, %v443
    %v508 = vpack.c.bf16 %v448, %v446
    %v509 = vpack.c.bf16 %v449, %v447
    %v510 = vpack.c.bf16 %v452, %v450
    %v511 = vpack.c.bf16 %v453, %v451
    %v512 = vpack.c.bf16 %v456, %v454
    %v513 = vpack.c.bf16 %v457, %v455
    %v514 = vpack.c.bf16 %v460, %v458
    %v515 = vpack.c.bf16 %v461, %v459
    %v516 = vpack.c.bf16 %v464, %v462
    %v517 = vpack.c.bf16 %v465, %v463
    %v518 = vpack.c.bf16 %v468, %v466
    %v519 = vpack.c.bf16 %v469, %v467
    %v520 = vpack.c.bf16 %v472, %v470
    %v521 = vpack.c.bf16 %v473, %v471
    %v522 = vpack.c.bf16 %v476, %v474
    %v523 = vpack.c.bf16 %v477, %v475
    %v524 = vpack.c.bf16 %v480, %v478
    %v525 = vpack.c.bf16 %v481, %v479
    %v526 = vpack.c.bf16 %v484, %v482
    %v527 = vpack.c.bf16 %v485, %v483
    %v528 = vpack.c.bf16 %v488, %v486
    %v529 = vpack.c.bf16 %v489, %v487
    %v530 = vpack.c.bf16 %v492, %v490
    %v531 = vpack.c.bf16 %v493, %v491
    %v532 = vpack.c.bf16 %v496, %v494
    %v533 = vpack.c.bf16 %v497, %v495
    %v534 = vpack.c.bf16 %v500, %v498
    %v535 = vpack.c.bf16 %v501, %v499
    %v536 = vpack.c.bf16 %v504, %v502
    %v537 = vpack.c.bf16 %v505, %v503
    %v538 = vld [vmem:[%s3] sm:$0xff]
    %v539 = vld [vmem:[%s3 + $0x8] sm:$0xff]
    %v540 = vld [vmem:[%s3 + $0x10] sm:$0xff]
    %v541 = vld [vmem:[%s3 + $0x18] sm:$0xff]
    %v542 = vld [vmem:[%s3 + $0x20] sm:$0xff]
    %v543 = vld [vmem:[%s3 + $0x28] sm:$0xff]
    %v544 = vld [vmem:[%s3 + $0x30] sm:$0xff]
    %v545 = vld [vmem:[%s3 + $0x38] sm:$0xff]
    %v546 = vld [vmem:[%s3 + $0x40] sm:$0xff]
    %v547 = vld [vmem:[%s3 + $0x48] sm:$0xff]
    %v548 = vld [vmem:[%s3 + $0x50] sm:$0xff]
    %v549 = vld [vmem:[%s3 + $0x58] sm:$0xff]
    %v550 = vld [vmem:[%s3 + $0x60] sm:$0xff]
    %v551 = vld [vmem:[%s3 + $0x68] sm:$0xff]
    %v552 = vld [vmem:[%s3 + $0x70] sm:$0xff]
    %v553 = vld [vmem:[%s3 + $0x78] sm:$0xff]
    %v554 = vld [vmem:[%s3 + $0x80] sm:$0xff]
    %v555 = vld [vmem:[%s3 + $0x88] sm:$0xff]
    %v556 = vld [vmem:[%s3 + $0x90] sm:$0xff]
    %v557 = vld [vmem:[%s3 + $0x98] sm:$0xff]
    %v558 = vld [vmem:[%s3 + $0xa0] sm:$0xff]
    %v559 = vld [vmem:[%s3 + $0xa8] sm:$0xff]
    %v560 = vld [vmem:[%s3 + $0xb0] sm:$0xff]
    %v561 = vld [vmem:[%s3 + $0xb8] sm:$0xff]
    %v562 = vld [vmem:[%s3 + $0xc0] sm:$0xff]
    %v563 = vld [vmem:[%s3 + $0xc8] sm:$0xff]
    %v564 = vld [vmem:[%s3 + $0xd0] sm:$0xff]
    %v565 = vld [vmem:[%s3 + $0xd8] sm:$0xff]
    %v566 = vld [vmem:[%s3 + $0xe0] sm:$0xff]
    %v567 = vld [vmem:[%s3 + $0xe8] sm:$0xff]
    %v568 = vld [vmem:[%s3 + $0xf0] sm:$0xff]
    %v569 = vld [vmem:[%s3 + $0xf8] sm:$0xff]
    %v570 = vld [vmem:[%s4] sm:$0x3]
    %v572 = vlaneseq
    %v573 = vshrl.u32 %v572, 7
    %v574 = vsub.s32 0, %v573
    %v575 = vrot.slane %v570, %v574
    %v576 = vlaneseq
    %v577 = vshrl.u32 %v576, 7
    %v578 = vsub.s32 1, %v577
    %v579 = vrot.slane %v570, %v578
    %v614 = vunpack.c.l.b16 %v538
    %v615 = vunpack.c.h.b16 %v538
    %v616 = vunpack.c.l.b16 %v539
    %v617 = vunpack.c.h.b16 %v539
    %v618 = vunpack.c.l.b16 %v540
    %v619 = vunpack.c.h.b16 %v540
    %v620 = vunpack.c.l.b16 %v541
    %v621 = vunpack.c.h.b16 %v541
    %v622 = vunpack.c.l.b16 %v542
    %v623 = vunpack.c.h.b16 %v542
    %v624 = vunpack.c.l.b16 %v543
    %v625 = vunpack.c.h.b16 %v543
    %v626 = vunpack.c.l.b16 %v544
    %v627 = vunpack.c.h.b16 %v544
    %v628 = vunpack.c.l.b16 %v545
    %v629 = vunpack.c.h.b16 %v545
    %v630 = vunpack.c.l.b16 %v546
    %v631 = vunpack.c.h.b16 %v546
    %v632 = vunpack.c.l.b16 %v547
    %v633 = vunpack.c.h.b16 %v547
    %v634 = vunpack.c.l.b16 %v548
    %v635 = vunpack.c.h.b16 %v548
    %v636 = vunpack.c.l.b16 %v549
    %v637 = vunpack.c.h.b16 %v549
    %v638 = vunpack.c.l.b16 %v550
    %v639 = vunpack.c.h.b16 %v550
    %v640 = vunpack.c.l.b16 %v551
    %v641 = vunpack.c.h.b16 %v551
    %v642 = vunpack.c.l.b16 %v552
    %v643 = vunpack.c.h.b16 %v552
    %v644 = vunpack.c.l.b16 %v553
    %v645 = vunpack.c.h.b16 %v553
    %v646 = vunpack.c.l.b16 %v554
    %v647 = vunpack.c.h.b16 %v554
    %v648 = vunpack.c.l.b16 %v555
    %v649 = vunpack.c.h.b16 %v555
    %v650 = vunpack.c.l.b16 %v556
    %v651 = vunpack.c.h.b16 %v556
    %v652 = vunpack.c.l.b16 %v557
    %v653 = vunpack.c.h.b16 %v557
    %v654 = vunpack.c.l.b16 %v558
    %v655 = vunpack.c.h.b16 %v558
    %v656 = vunpack.c.l.b16 %v559
    %v657 = vunpack.c.h.b16 %v559
    %v658 = vunpack.c.l.b16 %v560
    %v659 = vunpack.c.h.b16 %v560
    %v660 = vunpack.c.l.b16 %v561
    %v661 = vunpack.c.h.b16 %v561
    %v662 = vunpack.c.l.b16 %v562
    %v663 = vunpack.c.h.b16 %v562
    %v664 = vunpack.c.l.b16 %v563
    %v665 = vunpack.c.h.b16 %v563
    %v666 = vunpack.c.l.b16 %v564
    %v667 = vunpack.c.h.b16 %v564
    %v668 = vunpack.c.l.b16 %v565
    %v669 = vunpack.c.h.b16 %v565
    %v670 = vunpack.c.l.b16 %v566
    %v671 = vunpack.c.h.b16 %v566
    %v672 = vunpack.c.l.b16 %v567
    %v673 = vunpack.c.h.b16 %v567
    %v674 = vunpack.c.l.b16 %v568
    %v675 = vunpack.c.h.b16 %v568
    %v676 = vunpack.c.l.b16 %v569
    %v677 = vunpack.c.h.b16 %v569
    %v678 = vpack.c.b16 %v616, %v614
    %v679 = vpack.c.b16 %v617, %v615
    %v680 = vpack.c.b16 %v620, %v618
    %v681 = vpack.c.b16 %v621, %v619
    %v682 = vpack.c.b16 %v624, %v622
    %v683 = vpack.c.b16 %v625, %v623
    %v684 = vpack.c.b16 %v628, %v626
    %v685 = vpack.c.b16 %v629, %v627
    %v686 = vpack.c.b16 %v632, %v630
    %v687 = vpack.c.b16 %v633, %v631
    %v688 = vpack.c.b16 %v636, %v634
    %v689 = vpack.c.b16 %v637, %v635
    %v690 = vpack.c.b16 %v640, %v638
    %v691 = vpack.c.b16 %v641, %v639
    %v692 = vpack.c.b16 %v644, %v642
    %v693 = vpack.c.b16 %v645, %v643
    %v694 = vpack.c.b16 %v648, %v646
    %v695 = vpack.c.b16 %v649, %v647
    %v696 = vpack.c.b16 %v652, %v650
    %v697 = vpack.c.b16 %v653, %v651
    %v698 = vpack.c.b16 %v656, %v654
    %v699 = vpack.c.b16 %v657, %v655
    %v700 = vpack.c.b16 %v660, %v658
    %v701 = vpack.c.b16 %v661, %v659
    %v702 = vpack.c.b16 %v664, %v662
    %v703 = vpack.c.b16 %v665, %v663
    %v704 = vpack.c.b16 %v668, %v666
    %v705 = vpack.c.b16 %v669, %v667
    %v706 = vpack.c.b16 %v672, %v670
    %v707 = vpack.c.b16 %v673, %v671
    %v708 = vpack.c.b16 %v676, %v674
    %v709 = vpack.c.b16 %v677, %v675
    %742 = vmatprep.subr.bf16.mxu0 %v679
    %743 = vmatpush1.bf16.msra.mxu0 %v678
    %744 = vmatprep.subr.bf16.mxu0 %v681
    %745 = vmatpush1.bf16.msra.mxu0 %v680
    %746 = vmatprep.subr.bf16.mxu0 %v683
    %747 = vmatpush1.bf16.msra.mxu0 %v682
    %748 = vmatprep.subr.bf16.mxu0 %v685
    %749 = vmatpush1.bf16.msra.mxu0 %v684
    %750 = vmatprep.subr.bf16.mxu0 %v687
    %751 = vmatpush1.bf16.msra.mxu0 %v686
    %752 = vmatprep.subr.bf16.mxu0 %v689
    %753 = vmatpush1.bf16.msra.mxu0 %v688
    %754 = vmatprep.subr.bf16.mxu0 %v691
    %755 = vmatpush1.bf16.msra.mxu0 %v690
    %756 = vmatprep.subr.bf16.mxu0 %v693
    %757 = vmatpush1.bf16.msra.mxu0 %v692
    %758 = vmatprep.subr.bf16.mxu0 %v695
    %759 = vmatpush1.bf16.msra.mxu0 %v694
    %760 = vmatprep.subr.bf16.mxu0 %v697
    %761 = vmatpush1.bf16.msra.mxu0 %v696
    %762 = vmatprep.subr.bf16.mxu0 %v699
    %763 = vmatpush1.bf16.msra.mxu0 %v698
    %764 = vmatprep.subr.bf16.mxu0 %v701
    %765 = vmatpush1.bf16.msra.mxu0 %v700
    %766 = vmatprep.subr.bf16.mxu0 %v703
    %767 = vmatpush1.bf16.msra.mxu0 %v702
    %768 = vmatprep.subr.bf16.mxu0 %v705
    %769 = vmatpush1.bf16.msra.mxu0 %v704
    %770 = vmatprep.subr.bf16.mxu0 %v707
    %771 = vmatpush1.bf16.msra.mxu0 %v706
    %772 = vmatprep.subr.bf16.mxu0 %v709
    %773 = vmatpush1.bf16.msra.mxu0 %v708
    %774 = vmatprep.mubr.bf16.mxu0 %v507
    %775 = vmatmul.mubr.bf16.gmra.mrb[0].mxu0 %v506
    %v776 = vpop.f32.mrb[0].mxu0
    %v777 = vadd.f32 %v575, %v776
    %v778 = vpop.f32.mrb[0].mxu0
    %v779 = vadd.f32 %v579, %v778
    %v780 = vpop.f32.mrb[0].mxu0
    %v781 = vadd.f32 %v575, %v780
    %v782 = vpop.f32.mrb[0].mxu0
    %v783 = vadd.f32 %v579, %v782
    %784 = vmatprep.mubr.bf16.mxu0 %v509
    %785 = vmatmul.mubr.bf16.gmra.mrb[0].mxu0 %v508
    %v786 = vpop.f32.mrb[0].mxu0
    %v787 = vadd.f32 %v575, %v786
    %v788 = vpop.f32.mrb[0].mxu0
    %v789 = vadd.f32 %v579, %v788
    %v790 = vpop.f32.mrb[0].mxu0
    %v791 = vadd.f32 %v575, %v790
    %v792 = vpop.f32.mrb[0].mxu0
    %v793 = vadd.f32 %v579, %v792
    %794 = vmatprep.mubr.bf16.mxu0 %v511
    %795 = vmatmul.mubr.bf16.gmra.mrb[0].mxu0 %v510
    %v796 = vpop.f32.mrb[0].mxu0
    %v797 = vadd.f32 %v575, %v796
    %v798 = vpop.f32.mrb[0].mxu0
    %v799 = vadd.f32 %v579, %v798
    %v800 = vpop.f32.mrb[0].mxu0
    %v801 = vadd.f32 %v575, %v800
    %v802 = vpop.f32.mrb[0].mxu0
    %v803 = vadd.f32 %v579, %v802
    %804 = vmatprep.mubr.bf16.mxu0 %v513
    %805 = vmatmul.mubr.bf16.gmra.mrb[0].mxu0 %v512
    %v806 = vpop.f32.mrb[0].mxu0
    %v807 = vadd.f32 %v575, %v806
    %v808 = vpop.f32.mrb[0].mxu0
    %v809 = vadd.f32 %v579, %v808
    %v810 = vpop.f32.mrb[0].mxu0
    %v811 = vadd.f32 %v575, %v810
    %v812 = vpop.f32.mrb[0].mxu0
    %v813 = vadd.f32 %v579, %v812
    %814 = vmatprep.mubr.bf16.mxu0 %v515
    %815 = vmatmul.mubr.bf16.gmra.mrb[0].mxu0 %v514
    %v816 = vpop.f32.mrb[0].mxu0
    %v817 = vadd.f32 %v575, %v816
    %v818 = vpop.f32.mrb[0].mxu0
    %v819 = vadd.f32 %v579, %v818
    %v820 = vpop.f32.mrb[0].mxu0
    %v821 = vadd.f32 %v575, %v820
    %v822 = vpop.f32.mrb[0].mxu0
    %v823 = vadd.f32 %v579, %v822
    %824 = vmatprep.mubr.bf16.mxu0 %v517
    %825 = vmatmul.mubr.bf16.gmra.mrb[0].mxu0 %v516
    %v826 = vpop.f32.mrb[0].mxu0
    %v827 = vadd.f32 %v575, %v826
    %v828 = vpop.f32.mrb[0].mxu0
    %v829 = vadd.f32 %v579, %v828
    %v830 = vpop.f32.mrb[0].mxu0
    %v831 = vadd.f32 %v575, %v830
    %v832 = vpop.f32.mrb[0].mxu0
    %v833 = vadd.f32 %v579, %v832
    %834 = vmatprep.mubr.bf16.mxu0 %v519
    %835 = vmatmul.mubr.bf16.gmra.mrb[0].mxu0 %v518
    %v836 = vpop.f32.mrb[0].mxu0
    %v837 = vadd.f32 %v575, %v836
    %v838 = vpop.f32.mrb[0].mxu0
    %v839 = vadd.f32 %v579, %v838
    %v840 = vpop.f32.mrb[0].mxu0
    %v841 = vadd.f32 %v575, %v840
    %v842 = vpop.f32.mrb[0].mxu0
    %v843 = vadd.f32 %v579, %v842
    %844 = vmatprep.mubr.bf16.mxu0 %v521
    %845 = vmatmul.mubr.bf16.gmra.mrb[0].mxu0 %v520
    %v846 = vpop.f32.mrb[0].mxu0
    %v847 = vadd.f32 %v575, %v846
    %v848 = vpop.f32.mrb[0].mxu0
    %v849 = vadd.f32 %v579, %v848
    %v850 = vpop.f32.mrb[0].mxu0
    %v851 = vadd.f32 %v575, %v850
    %v852 = vpop.f32.mrb[0].mxu0
    %v853 = vadd.f32 %v579, %v852
    %854 = vmatprep.mubr.bf16.mxu0 %v523
    %855 = vmatmul.mubr.bf16.gmra.mrb[0].mxu0 %v522
    %v856 = vpop.f32.mrb[0].mxu0
    %v857 = vadd.f32 %v575, %v856
    %v858 = vpop.f32.mrb[0].mxu0
    %v859 = vadd.f32 %v579, %v858
    %v860 = vpop.f32.mrb[0].mxu0
    %v861 = vadd.f32 %v575, %v860
    %v862 = vpop.f32.mrb[0].mxu0
    %v863 = vadd.f32 %v579, %v862
    %864 = vmatprep.mubr.bf16.mxu0 %v525
    %865 = vmatmul.mubr.bf16.gmra.mrb[0].mxu0 %v524
    %v866 = vpop.f32.mrb[0].mxu0
    %v867 = vadd.f32 %v575, %v866
    %v868 = vpop.f32.mrb[0].mxu0
    %v869 = vadd.f32 %v579, %v868
    %v870 = vpop.f32.mrb[0].mxu0
    %v871 = vadd.f32 %v575, %v870
    %v872 = vpop.f32.mrb[0].mxu0
    %v873 = vadd.f32 %v579, %v872
    %874 = vmatprep.mubr.bf16.mxu0 %v527
    %875 = vmatmul.mubr.bf16.gmra.mrb[0].mxu0 %v526
    %v876 = vpop.f32.mrb[0].mxu0
    %v877 = vadd.f32 %v575, %v876
    %v878 = vpop.f32.mrb[0].mxu0
    %v879 = vadd.f32 %v579, %v878
    %v880 = vpop.f32.mrb[0].mxu0
    %v881 = vadd.f32 %v575, %v880
    %v882 = vpop.f32.mrb[0].mxu0
    %v883 = vadd.f32 %v579, %v882
    %884 = vmatprep.mubr.bf16.mxu0 %v529
    %885 = vmatmul.mubr.bf16.gmra.mrb[0].mxu0 %v528
    %v886 = vpop.f32.mrb[0].mxu0
    %v887 = vadd.f32 %v575, %v886
    %v888 = vpop.f32.mrb[0].mxu0
    %v889 = vadd.f32 %v579, %v888
    %v890 = vpop.f32.mrb[0].mxu0
    %v891 = vadd.f32 %v575, %v890
    %v892 = vpop.f32.mrb[0].mxu0
    %v893 = vadd.f32 %v579, %v892
    %894 = vmatprep.mubr.bf16.mxu0 %v531
    %895 = vmatmul.mubr.bf16.gmra.mrb[0].mxu0 %v530
    %v896 = vpop.f32.mrb[0].mxu0
    %v897 = vadd.f32 %v575, %v896
    %v898 = vpop.f32.mrb[0].mxu0
    %v899 = vadd.f32 %v579, %v898
    %v900 = vpop.f32.mrb[0].mxu0
    %v901 = vadd.f32 %v575, %v900
    %v902 = vpop.f32.mrb[0].mxu0
    %v903 = vadd.f32 %v579, %v902
    %904 = vmatprep.mubr.bf16.mxu0 %v533
    %905 = vmatmul.mubr.bf16.gmra.mrb[0].mxu0 %v532
    %v906 = vpop.f32.mrb[0].mxu0
    %v907 = vadd.f32 %v575, %v906
    %v908 = vpop.f32.mrb[0].mxu0
    %v909 = vadd.f32 %v579, %v908
    %v910 = vpop.f32.mrb[0].mxu0
    %v911 = vadd.f32 %v575, %v910
    %v912 = vpop.f32.mrb[0].mxu0
    %v913 = vadd.f32 %v579, %v912
    %914 = vmatprep.mubr.bf16.mxu0 %v535
    %915 = vmatmul.mubr.bf16.gmra.mrb[0].mxu0 %v534
    %v916 = vpop.f32.mrb[0].mxu0
    %v917 = vadd.f32 %v575, %v916
    %v918 = vpop.f32.mrb[0].mxu0
    %v919 = vadd.f32 %v579, %v918
    %v920 = vpop.f32.mrb[0].mxu0
    %v921 = vadd.f32 %v575, %v920
    %v922 = vpop.f32.mrb[0].mxu0
    %v923 = vadd.f32 %v579, %v922
    %924 = vmatprep.mubr.bf16.mxu0 %v537
    %925 = vmatmul.mubr.bf16.gmra.mrb[0].mxu0 %v536
    %v926 = vpop.f32.mrb[0].mxu0
    %v927 = vadd.f32 %v575, %v926
    %v928 = vpop.f32.mrb[0].mxu0
    %v929 = vadd.f32 %v579, %v928
    %v930 = vpop.f32.mrb[0].mxu0
    %v931 = vadd.f32 %v575, %v930
    %v932 = vpop.f32.mrb[0].mxu0
    %v933 = vadd.f32 %v579, %v932
    %934 = vdwg.mxu0
    %v935 = vmax.f32 %v777, 0.0
    %v936 = vmax.f32 %v779, 0.0
    %v937 = vmax.f32 %v781, 0.0
    %v938 = vmax.f32 %v783, 0.0
    %v939 = vmax.f32 %v787, 0.0
    %v940 = vmax.f32 %v789, 0.0
    %v941 = vmax.f32 %v791, 0.0
    %v942 = vmax.f32 %v793, 0.0
    %v943 = vmax.f32 %v797, 0.0
    %v944 = vmax.f32 %v799, 0.0
    %v945 = vmax.f32 %v801, 0.0
    %v946 = vmax.f32 %v803, 0.0
    %v947 = vmax.f32 %v807, 0.0
    %v948 = vmax.f32 %v809, 0.0
    %v949 = vmax.f32 %v811, 0.0
    %v950 = vmax.f32 %v813, 0.0
    %v951 = vmax.f32 %v817, 0.0
    %v952 = vmax.f32 %v819, 0.0
    %v953 = vmax.f32 %v821, 0.0
    %v954 = vmax.f32 %v823, 0.0
    %v955 = vmax.f32 %v827, 0.0
    %v956 = vmax.f32 %v829, 0.0
    %v957 = vmax.f32 %v831, 0.0
    %v958 = vmax.f32 %v833, 0.0
    %v959 = vmax.f32 %v837, 0.0
    %v960 = vmax.f32 %v839, 0.0
    %v961 = vmax.f32 %v841, 0.0
    %v962 = vmax.f32 %v843, 0.0
    %v963 = vmax.f32 %v847, 0.0
    %v964 = vmax.f32 %v849, 0.0
    %v965 = vmax.f32 %v851, 0.0
    %v966 = vmax.f32 %v853, 0.0
    %v967 = vmax.f32 %v857, 0.0
    %v968 = vmax.f32 %v859, 0.0
    %v969 = vmax.f32 %v861, 0.0
    %v970 = vmax.f32 %v863, 0.0
    %v971 = vmax.f32 %v867, 0.0
    %v972 = vmax.f32 %v869, 0.0
    %v973 = vmax.f32 %v871, 0.0
    %v974 = vmax.f32 %v873, 0.0
    %v975 = vmax.f32 %v877, 0.0
    %v976 = vmax.f32 %v879, 0.0
    %v977 = vmax.f32 %v881, 0.0
    %v978 = vmax.f32 %v883, 0.0
    %v979 = vmax.f32 %v887, 0.0
    %v980 = vmax.f32 %v889, 0.0
    %v981 = vmax.f32 %v891, 0.0
    %v982 = vmax.f32 %v893, 0.0
    %v983 = vmax.f32 %v897, 0.0
    %v984 = vmax.f32 %v899, 0.0
    %v985 = vmax.f32 %v901, 0.0
    %v986 = vmax.f32 %v903, 0.0
    %v987 = vmax.f32 %v907, 0.0
    %v988 = vmax.f32 %v909, 0.0
    %v989 = vmax.f32 %v911, 0.0
    %v990 = vmax.f32 %v913, 0.0
    %v991 = vmax.f32 %v917, 0.0
    %v992 = vmax.f32 %v919, 0.0
    %v993 = vmax.f32 %v921, 0.0
    %v994 = vmax.f32 %v923, 0.0
    %v995 = vmax.f32 %v927, 0.0
    %v996 = vmax.f32 %v929, 0.0
    %v997 = vmax.f32 %v931, 0.0
    %v998 = vmax.f32 %v933, 0.0
    %v999 = vpack.c.bf16 %v937, %v935
    %v1000 = vpack.c.bf16 %v938, %v936
    %v1001 = vpack.c.bf16 %v941, %v939
    %v1002 = vpack.c.bf16 %v942, %v940
    %v1003 = vpack.c.bf16 %v945, %v943
    %v1004 = vpack.c.bf16 %v946, %v944
    %v1005 = vpack.c.bf16 %v949, %v947
    %v1006 = vpack.c.bf16 %v950, %v948
    %v1007 = vpack.c.bf16 %v953, %v951
    %v1008 = vpack.c.bf16 %v954, %v952
    %v1009 = vpack.c.bf16 %v957, %v955
    %v1010 = vpack.c.bf16 %v958, %v956
    %v1011 = vpack.c.bf16 %v961, %v959
    %v1012 = vpack.c.bf16 %v962, %v960
    %v1013 = vpack.c.bf16 %v965, %v963
    %v1014 = vpack.c.bf16 %v966, %v964
    %v1015 = vpack.c.bf16 %v969, %v967
    %v1016 = vpack.c.bf16 %v970, %v968
    %v1017 = vpack.c.bf16 %v973, %v971
    %v1018 = vpack.c.bf16 %v974, %v972
    %v1019 = vpack.c.bf16 %v977, %v975
    %v1020 = vpack.c.bf16 %v978, %v976
    %v1021 = vpack.c.bf16 %v981, %v979
    %v1022 = vpack.c.bf16 %v982, %v980
    %v1023 = vpack.c.bf16 %v985, %v983
    %v1024 = vpack.c.bf16 %v986, %v984
    %v1025 = vpack.c.bf16 %v989, %v987
    %v1026 = vpack.c.bf16 %v990, %v988
    %v1027 = vpack.c.bf16 %v993, %v991
    %v1028 = vpack.c.bf16 %v994, %v992
    %v1029 = vpack.c.bf16 %v997, %v995
    %v1030 = vpack.c.bf16 %v998, %v996
    %v1031 = vld [vmem:[#allocation2] sm:$0xf]
    %v1032 = vld [vmem:[#allocation2 + $0x4] sm:$0xf]
    %v1033 = vld [vmem:[#allocation2 + $0x8] sm:$0xf]
    %v1034 = vld [vmem:[#allocation2 + $0xc] sm:$0xf]
    %v1035 = vld [vmem:[#allocation2 + $0x10] sm:$0xf]
    %v1036 = vld [vmem:[#allocation2 + $0x14] sm:$0xf]
    %v1037 = vld [vmem:[#allocation2 + $0x18] sm:$0xf]
    %v1038 = vld [vmem:[#allocation2 + $0x1c] sm:$0xf]
    %v1039 = vld [vmem:[#allocation2 + $0x20] sm:$0xf]
    %v1040 = vld [vmem:[#allocation2 + $0x24] sm:$0xf]
    %v1041 = vld [vmem:[#allocation2 + $0x28] sm:$0xf]
    %v1042 = vld [vmem:[#allocation2 + $0x2c] sm:$0xf]
    %v1043 = vld [vmem:[#allocation2 + $0x30] sm:$0xf]
    %v1044 = vld [vmem:[#allocation2 + $0x34] sm:$0xf]
    %v1045 = vld [vmem:[#allocation2 + $0x38] sm:$0xf]
    %v1046 = vld [vmem:[#allocation2 + $0x3c] sm:$0xf]
    %v1047 = vld [vmem:[#allocation2 + $0x40] sm:$0xf]
    %v1048 = vld [vmem:[#allocation2 + $0x44] sm:$0xf]
    %v1049 = vld [vmem:[#allocation2 + $0x48] sm:$0xf]
    %v1050 = vld [vmem:[#allocation2 + $0x4c] sm:$0xf]
    %v1051 = vld [vmem:[#allocation2 + $0x50] sm:$0xf]
    %v1052 = vld [vmem:[#allocation2 + $0x54] sm:$0xf]
    %v1053 = vld [vmem:[#allocation2 + $0x58] sm:$0xf]
    %v1054 = vld [vmem:[#allocation2 + $0x5c] sm:$0xf]
    %v1055 = vld [vmem:[#allocation2 + $0x60] sm:$0xf]
    %v1056 = vld [vmem:[#allocation2 + $0x64] sm:$0xf]
    %v1057 = vld [vmem:[#allocation2 + $0x68] sm:$0xf]
    %v1058 = vld [vmem:[#allocation2 + $0x6c] sm:$0xf]
    %v1059 = vld [vmem:[#allocation2 + $0x70] sm:$0xf]
    %v1060 = vld [vmem:[#allocation2 + $0x74] sm:$0xf]
    %v1061 = vld [vmem:[#allocation2 + $0x78] sm:$0xf]
    %v1062 = vld [vmem:[#allocation2 + $0x7c] sm:$0xf]
    %v1063 = vld [vmem:[%s6] sm:$0x1]
    %v1065 = vlaneseq
    %v1066 = vshrl.u32 %v1065, 7
    %v1067 = vsub.s32 0, %v1066
    %v1068 = vrot.slane %v1063, %v1067
    %v1102 = vunpack.c.l.b16 %v1031
    %v1103 = vunpack.c.l.b16 %v1032
    %v1104 = vunpack.c.l.b16 %v1033
    %v1105 = vunpack.c.l.b16 %v1034
    %v1106 = vunpack.c.l.b16 %v1035
    %v1107 = vunpack.c.l.b16 %v1036
    %v1108 = vunpack.c.l.b16 %v1037
    %v1109 = vunpack.c.l.b16 %v1038
    %v1110 = vunpack.c.l.b16 %v1039
    %v1111 = vunpack.c.l.b16 %v1040
    %v1112 = vunpack.c.l.b16 %v1041
    %v1113 = vunpack.c.l.b16 %v1042
    %v1114 = vunpack.c.l.b16 %v1043
    %v1115 = vunpack.c.l.b16 %v1044
    %v1116 = vunpack.c.l.b16 %v1045
    %v1117 = vunpack.c.l.b16 %v1046
    %v1118 = vunpack.c.l.b16 %v1047
    %v1119 = vunpack.c.l.b16 %v1048
    %v1120 = vunpack.c.l.b16 %v1049
    %v1121 = vunpack.c.l.b16 %v1050
    %v1122 = vunpack.c.l.b16 %v1051
    %v1123 = vunpack.c.l.b16 %v1052
    %v1124 = vunpack.c.l.b16 %v1053
    %v1125 = vunpack.c.l.b16 %v1054
    %v1126 = vunpack.c.l.b16 %v1055
    %v1127 = vunpack.c.l.b16 %v1056
    %v1128 = vunpack.c.l.b16 %v1057
    %v1129 = vunpack.c.l.b16 %v1058
    %v1130 = vunpack.c.l.b16 %v1059
    %v1131 = vunpack.c.l.b16 %v1060
    %v1132 = vunpack.c.l.b16 %v1061
    %v1133 = vunpack.c.l.b16 %v1062
    %v1134 = vpack.c.b16 %v1103, %v1102
    %v1135 = vpack.c.b16 %v1105, %v1104
    %v1136 = vpack.c.b16 %v1107, %v1106
    %v1137 = vpack.c.b16 %v1109, %v1108
    %v1138 = vpack.c.b16 %v1111, %v1110
    %v1139 = vpack.c.b16 %v1113, %v1112
    %v1140 = vpack.c.b16 %v1115, %v1114
    %v1141 = vpack.c.b16 %v1117, %v1116
    %v1142 = vpack.c.b16 %v1119, %v1118
    %v1143 = vpack.c.b16 %v1121, %v1120
    %v1144 = vpack.c.b16 %v1123, %v1122
    %v1145 = vpack.c.b16 %v1125, %v1124
    %v1146 = vpack.c.b16 %v1127, %v1126
    %v1147 = vpack.c.b16 %v1129, %v1128
    %v1148 = vpack.c.b16 %v1131, %v1130
    %v1149 = vpack.c.b16 %v1133, %v1132
    %1166 = vmatprep.subr.bf16.mxu0 0
    %1167 = vmatpush1.bf16.msra.mxu0 %v1134
    %1168 = vmatprep.subr.bf16.mxu0 0
    %1169 = vmatpush1.bf16.msra.mxu0 %v1135
    %1170 = vmatprep.subr.bf16.mxu0 0
    %1171 = vmatpush1.bf16.msra.mxu0 %v1136
    %1172 = vmatprep.subr.bf16.mxu0 0
    %1173 = vmatpush1.bf16.msra.mxu0 %v1137
    %1174 = vmatprep.subr.bf16.mxu0 0
    %1175 = vmatpush1.bf16.msra.mxu0 %v1138
    %1176 = vmatprep.subr.bf16.mxu0 0
    %1177 = vmatpush1.bf16.msra.mxu0 %v1139
    %1178 = vmatprep.subr.bf16.mxu0 0
    %1179 = vmatpush1.bf16.msra.mxu0 %v1140
    %1180 = vmatprep.subr.bf16.mxu0 0
    %1181 = vmatpush1.bf16.msra.mxu0 %v1141
    %1182 = vmatprep.subr.bf16.mxu0 0
    %1183 = vmatpush1.bf16.msra.mxu0 %v1142
    %1184 = vmatprep.subr.bf16.mxu0 0
    %1185 = vmatpush1.bf16.msra.mxu0 %v1143
    %1186 = vmatprep.subr.bf16.mxu0 0
    %1187 = vmatpush1.bf16.msra.mxu0 %v1144
    %1188 = vmatprep.subr.bf16.mxu0 0
    %1189 = vmatpush1.bf16.msra.mxu0 %v1145
    %1190 = vmatprep.subr.bf16.mxu0 0
    %1191 = vmatpush1.bf16.msra.mxu0 %v1146
    %1192 = vmatprep.subr.bf16.mxu0 0
    %1193 = vmatpush1.bf16.msra.mxu0 %v1147
    %1194 = vmatprep.subr.bf16.mxu0 0
    %1195 = vmatpush1.bf16.msra.mxu0 %v1148
    %1196 = vmatprep.subr.bf16.mxu0 0
    %1197 = vmatpush1.bf16.msra.mxu0 %v1149
    %1198 = vmatprep.mubr.bf16.mxu0 %v1000
    %1199 = vmatmul.mubr.bf16.gmra.mrb[0].mxu0 %v999
    %v1200 = vpop.f32.mrb[0].mxu0
    %v1201 = vadd.f32 %v1068, %v1200
    %v1202 = vpop.f32.mrb[0].mxu0
    %v1203 = vpop.f32.mrb[0].mxu0
    %v1204 = vadd.f32 %v1068, %v1203
    %v1205 = vpop.f32.mrb[0].mxu0
    %1206 = vmatprep.mubr.bf16.mxu0 %v1002
    %1207 = vmatmul.mubr.bf16.gmra.mrb[0].mxu0 %v1001
    %v1208 = vpop.f32.mrb[0].mxu0
    %v1209 = vadd.f32 %v1068, %v1208
    %v1210 = vpop.f32.mrb[0].mxu0
    %v1211 = vpop.f32.mrb[0].mxu0
    %v1212 = vadd.f32 %v1068, %v1211
    %v1213 = vpop.f32.mrb[0].mxu0
    %1214 = vmatprep.mubr.bf16.mxu0 %v1004
    %1215 = vmatmul.mubr.bf16.gmra.mrb[0].mxu0 %v1003
    %v1216 = vpop.f32.mrb[0].mxu0
    %v1217 = vadd.f32 %v1068, %v1216
    %v1218 = vpop.f32.mrb[0].mxu0
    %v1219 = vpop.f32.mrb[0].mxu0
    %v1220 = vadd.f32 %v1068, %v1219
    %v1221 = vpop.f32.mrb[0].mxu0
    %1222 = vmatprep.mubr.bf16.mxu0 %v1006
    %1223 = vmatmul.mubr.bf16.gmra.mrb[0].mxu0 %v1005
    %v1224 = vpop.f32.mrb[0].mxu0
    %v1225 = vadd.f32 %v1068, %v1224
    %v1226 = vpop.f32.mrb[0].mxu0
    %v1227 = vpop.f32.mrb[0].mxu0
    %v1228 = vadd.f32 %v1068, %v1227
    %v1229 = vpop.f32.mrb[0].mxu0
    %1230 = vmatprep.mubr.bf16.mxu0 %v1008
    %1231 = vmatmul.mubr.bf16.gmra.mrb[0].mxu0 %v1007
    %v1232 = vpop.f32.mrb[0].mxu0
    %v1233 = vadd.f32 %v1068, %v1232
    %v1234 = vpop.f32.mrb[0].mxu0
    %v1235 = vpop.f32.mrb[0].mxu0
    %v1236 = vadd.f32 %v1068, %v1235
    %v1237 = vpop.f32.mrb[0].mxu0
    %1238 = vmatprep.mubr.bf16.mxu0 %v1010
    %1239 = vmatmul.mubr.bf16.gmra.mrb[0].mxu0 %v1009
    %v1240 = vpop.f32.mrb[0].mxu0
    %v1241 = vadd.f32 %v1068, %v1240
    %v1242 = vpop.f32.mrb[0].mxu0
    %v1243 = vpop.f32.mrb[0].mxu0
    %v1244 = vadd.f32 %v1068, %v1243
    %v1245 = vpop.f32.mrb[0].mxu0
    %1246 = vmatprep.mubr.bf16.mxu0 %v1012
    %1247 = vmatmul.mubr.bf16.gmra.mrb[0].mxu0 %v1011
    %v1248 = vpop.f32.mrb[0].mxu0
    %v1249 = vadd.f32 %v1068, %v1248
    %v1250 = vpop.f32.mrb[0].mxu0
    %v1251 = vpop.f32.mrb[0].mxu0
    %v1252 = vadd.f32 %v1068, %v1251
    %v1253 = vpop.f32.mrb[0].mxu0
    %1254 = vmatprep.mubr.bf16.mxu0 %v1014
    %1255 = vmatmul.mubr.bf16.gmra.mrb[0].mxu0 %v1013
    %v1256 = vpop.f32.mrb[0].mxu0
    %v1257 = vadd.f32 %v1068, %v1256
    %v1258 = vpop.f32.mrb[0].mxu0
    %v1259 = vpop.f32.mrb[0].mxu0
    %v1260 = vadd.f32 %v1068, %v1259
    %v1261 = vpop.f32.mrb[0].mxu0
    %1262 = vmatprep.mubr.bf16.mxu0 %v1016
    %1263 = vmatmul.mubr.bf16.gmra.mrb[0].mxu0 %v1015
    %v1264 = vpop.f32.mrb[0].mxu0
    %v1265 = vadd.f32 %v1068, %v1264
    %v1266 = vpop.f32.mrb[0].mxu0
    %v1267 = vpop.f32.mrb[0].mxu0
    %v1268 = vadd.f32 %v1068, %v1267
    %v1269 = vpop.f32.mrb[0].mxu0
    %1270 = vmatprep.mubr.bf16.mxu0 %v1018
    %1271 = vmatmul.mubr.bf16.gmra.mrb[0].mxu0 %v1017
    %v1272 = vpop.f32.mrb[0].mxu0
    %v1273 = vadd.f32 %v1068, %v1272
    %v1274 = vpop.f32.mrb[0].mxu0
    %v1275 = vpop.f32.mrb[0].mxu0
    %v1276 = vadd.f32 %v1068, %v1275
    %v1277 = vpop.f32.mrb[0].mxu0
    %1278 = vmatprep.mubr.bf16.mxu0 %v1020
    %1279 = vmatmul.mubr.bf16.gmra.mrb[0].mxu0 %v1019
    %v1280 = vpop.f32.mrb[0].mxu0
    %v1281 = vadd.f32 %v1068, %v1280
    %v1282 = vpop.f32.mrb[0].mxu0
    %v1283 = vpop.f32.mrb[0].mxu0
    %v1284 = vadd.f32 %v1068, %v1283
    %v1285 = vpop.f32.mrb[0].mxu0
    %1286 = vmatprep.mubr.bf16.mxu0 %v1022
    %1287 = vmatmul.mubr.bf16.gmra.mrb[0].mxu0 %v1021
    %v1288 = vpop.f32.mrb[0].mxu0
    %v1289 = vadd.f32 %v1068, %v1288
    %v1290 = vpop.f32.mrb[0].mxu0
    %v1291 = vpop.f32.mrb[0].mxu0
    %v1292 = vadd.f32 %v1068, %v1291
    %v1293 = vpop.f32.mrb[0].mxu0
    %1294 = vmatprep.mubr.bf16.mxu0 %v1024
    %1295 = vmatmul.mubr.bf16.gmra.mrb[0].mxu0 %v1023
    %v1296 = vpop.f32.mrb[0].mxu0
    %v1297 = vadd.f32 %v1068, %v1296
    %v1298 = vpop.f32.mrb[0].mxu0
    %v1299 = vpop.f32.mrb[0].mxu0
    %v1300 = vadd.f32 %v1068, %v1299
    %v1301 = vpop.f32.mrb[0].mxu0
    %1302 = vmatprep.mubr.bf16.mxu0 %v1026
    %1303 = vmatmul.mubr.bf16.gmra.mrb[0].mxu0 %v1025
    %v1304 = vpop.f32.mrb[0].mxu0
    %v1305 = vadd.f32 %v1068, %v1304
    %v1306 = vpop.f32.mrb[0].mxu0
    %v1307 = vpop.f32.mrb[0].mxu0
    %v1308 = vadd.f32 %v1068, %v1307
    %v1309 = vpop.f32.mrb[0].mxu0
    %1310 = vmatprep.mubr.bf16.mxu0 %v1028
    %1311 = vmatmul.mubr.bf16.gmra.mrb[0].mxu0 %v1027
    %v1312 = vpop.f32.mrb[0].mxu0
    %v1313 = vadd.f32 %v1068, %v1312
    %v1314 = vpop.f32.mrb[0].mxu0
    %v1315 = vpop.f32.mrb[0].mxu0
    %v1316 = vadd.f32 %v1068, %v1315
    %v1317 = vpop.f32.mrb[0].mxu0
    %1318 = vmatprep.mubr.bf16.mxu0 %v1030
    %1319 = vmatmul.mubr.bf16.gmra.mrb[0].mxu0 %v1029
    %v1320 = vpop.f32.mrb[0].mxu0
    %v1321 = vadd.f32 %v1068, %v1320
    %v1322 = vpop.f32.mrb[0].mxu0
    %v1323 = vpop.f32.mrb[0].mxu0
    %v1324 = vadd.f32 %v1068, %v1323
    %v1325 = vpop.f32.mrb[0].mxu0
    %1326 = vdwg.mxu0
    %v1327 = vtanh.pop %v1201
    %v1328 = vtanh.pop %v1204
    %v1329 = vtanh.pop %v1209
    %v1330 = vtanh.pop %v1212
    %v1331 = vtanh.pop %v1217
    %v1332 = vtanh.pop %v1220
    %v1333 = vtanh.pop %v1225
    %v1334 = vtanh.pop %v1228
    %v1335 = vtanh.pop %v1233
    %v1336 = vtanh.pop %v1236
    %v1337 = vtanh.pop %v1241
    %v1338 = vtanh.pop %v1244
    %v1339 = vtanh.pop %v1249
    %v1340 = vtanh.pop %v1252
    %v1341 = vtanh.pop %v1257
    %v1342 = vtanh.pop %v1260
    %v1343 = vtanh.pop %v1265
    %v1344 = vtanh.pop %v1268
    %v1345 = vtanh.pop %v1273
    %v1346 = vtanh.pop %v1276
    %v1347 = vtanh.pop %v1281
    %v1348 = vtanh.pop %v1284
    %v1349 = vtanh.pop %v1289
    %v1350 = vtanh.pop %v1292
    %v1351 = vtanh.pop %v1297
    %v1352 = vtanh.pop %v1300
    %v1353 = vtanh.pop %v1305
    %v1354 = vtanh.pop %v1308
    %v1355 = vtanh.pop %v1313
    %v1356 = vtanh.pop %v1316
    %v1357 = vtanh.pop %v1321
    %v1358 = vtanh.pop %v1324
    %v1359 = vmul.f32 %v1327, 2.0
    %v1360 = vmul.f32 %v1328, 2.0
    %v1361 = vmul.f32 %v1329, 2.0
    %v1362 = vmul.f32 %v1330, 2.0
    %v1363 = vmul.f32 %v1331, 2.0
    %v1364 = vmul.f32 %v1332, 2.0
    %v1365 = vmul.f32 %v1333, 2.0
    %v1366 = vmul.f32 %v1334, 2.0
    %v1367 = vmul.f32 %v1335, 2.0
    %v1368 = vmul.f32 %v1336, 2.0
    %v1369 = vmul.f32 %v1337, 2.0
    %v1370 = vmul.f32 %v1338, 2.0
    %v1371 = vmul.f32 %v1339, 2.0
    %v1372 = vmul.f32 %v1340, 2.0
    %v1373 = vmul.f32 %v1341, 2.0
    %v1374 = vmul.f32 %v1342, 2.0
    %v1375 = vmul.f32 %v1343, 2.0
    %v1376 = vmul.f32 %v1344, 2.0
    %v1377 = vmul.f32 %v1345, 2.0
    %v1378 = vmul.f32 %v1346, 2.0
    %v1379 = vmul.f32 %v1347, 2.0
    %v1380 = vmul.f32 %v1348, 2.0
    %v1381 = vmul.f32 %v1349, 2.0
    %v1382 = vmul.f32 %v1350, 2.0
    %v1383 = vmul.f32 %v1351, 2.0
    %v1384 = vmul.f32 %v1352, 2.0
    %v1385 = vmul.f32 %v1353, 2.0
    %v1386 = vmul.f32 %v1354, 2.0
    %v1387 = vmul.f32 %v1355, 2.0
    %v1388 = vmul.f32 %v1356, 2.0
    %v1389 = vmul.f32 %v1357, 2.0
    %v1390 = vmul.f32 %v1358, 2.0
    %1391 = vst [vmem:[#allocation5] sm:$0xff] %v1359
    %1392 = vst [vmem:[#allocation5 + $0x8] sm:$0xff] %v1360
    %1393 = vst [vmem:[#allocation5 + $0x10] sm:$0xff] %v1361
    %1394 = vst [vmem:[#allocation5 + $0x18] sm:$0xff] %v1362
    %1395 = vst [vmem:[#allocation5 + $0x20] sm:$0xff] %v1363
    %1396 = vst [vmem:[#allocation5 + $0x28] sm:$0xff] %v1364
    %1397 = vst [vmem:[#allocation5 + $0x30] sm:$0xff] %v1365
    %1398 = vst [vmem:[#allocation5 + $0x38] sm:$0xff] %v1366
    %1399 = vst [vmem:[#allocation5 + $0x40] sm:$0xff] %v1367
    %1400 = vst [vmem:[#allocation5 + $0x48] sm:$0xff] %v1368
    %1401 = vst [vmem:[#allocation5 + $0x50] sm:$0xff] %v1369
    %1402 = vst [vmem:[#allocation5 + $0x58] sm:$0xff] %v1370
    %1403 = vst [vmem:[#allocation5 + $0x60] sm:$0xff] %v1371
    %1404 = vst [vmem:[#allocation5 + $0x68] sm:$0xff] %v1372
    %1405 = vst [vmem:[#allocation5 + $0x70] sm:$0xff] %v1373
    %1406 = vst [vmem:[#allocation5 + $0x78] sm:$0xff] %v1374
    %1407 = vst [vmem:[#allocation5 + $0x80] sm:$0xff] %v1375
    %1408 = vst [vmem:[#allocation5 + $0x88] sm:$0xff] %v1376
    %1409 = vst [vmem:[#allocation5 + $0x90] sm:$0xff] %v1377
    %1410 = vst [vmem:[#allocation5 + $0x98] sm:$0xff] %v1378
    %1411 = vst [vmem:[#allocation5 + $0xa0] sm:$0xff] %v1379
    %1412 = vst [vmem:[#allocation5 + $0xa8] sm:$0xff] %v1380
    %1413 = vst [vmem:[#allocation5 + $0xb0] sm:$0xff] %v1381
    %1414 = vst [vmem:[#allocation5 + $0xb8] sm:$0xff] %v1382
    %1415 = vst [vmem:[#allocation5 + $0xc0] sm:$0xff] %v1383
    %1416 = vst [vmem:[#allocation5 + $0xc8] sm:$0xff] %v1384
    %1417 = vst [vmem:[#allocation5 + $0xd0] sm:$0xff] %v1385
    %1418 = vst [vmem:[#allocation5 + $0xd8] sm:$0xff] %v1386
    %1419 = vst [vmem:[#allocation5 + $0xe0] sm:$0xff] %v1387
    %1420 = vst [vmem:[#allocation5 + $0xe8] sm:$0xff] %v1388
    %1421 = vst [vmem:[#allocation5 + $0xf0] sm:$0xff] %v1389
    %1422 = vst [vmem:[#allocation5 + $0xf8] sm:$0xff] %v1390
    // Predicated region
    $region34: #{tpu_custom_call.1} parent=1 // pred_check
      _
    $region35: #{tpu_custom_call.1} parent=1 // pred_check_branch
      %1424 = sbr.rel (0) target = $region37
    $region36: #{tpu_custom_call.1} parent=1 // pred_region
      %s1426 = ssub.s32 4096, 4096
      %1427 = vsyncadd [#allocation4], %s1426
      %s1428 = sshll.u32 [#allocation5], 4
      %s1429 = int_to_ptr.vmem [resolvable:$true] %s1428
      %1434 = dma.vmem_to_hbm [thread:$0]  %s1429, 4096, %s7, [#allocation4], 128, 128, 8
    $region37: #{tpu_custom_call.1} parent=1 // pred_fallthru
      _
    // Predicated region
    $region38: #{tpu_custom_call.1} parent=1 // pred_check
      _
    $region39: #{tpu_custom_call.1} parent=1 // pred_check_branch
      %1436 = sbr.rel (0) target = $region41
    $region40: #{tpu_custom_call.1} parent=1 // pred_region
      %1437 = dma.done [#allocation4], 4096
    $region41: #{tpu_custom_call.1} parent=1 // pred_fallthru
      _
    %1438 = vsyncpa [#allocation3], 1
    %1439 = vsyncpa [#allocation4], 1

</llo_original>
